<compile_context>
chip_gen: v7x
topology: tpu7x:2x2x1
jax: 0.10.0
libtpu: 0.0.40
codegen_flags: <defaults>
</compile_context>

<pallas_src>
import functools

import jax
import jax.numpy as jnp
from jax.experimental import pallas as pl
from jax.experimental.pallas import tpu as pltpu


def _round_up(x, m):
    return ((x + m - 1) // m) * m


def _vmem_capacity_bytes():
    """Physical VMEM per core; conservative fallback if the query fails."""
    try:
        cap = getattr(pltpu.get_tpu_info(), "vmem_capacity_bytes", None)
        if cap:
            return int(cap)
    except Exception:
        pass
    return 64 * 1024 * 1024  # v7x per-TC VMEM (smallest current generation)


def _pad_feature_dim(emb_weight):
    """Pad the feature dim to a multiple of 128 so output stores are lane-dense."""
    _, dim = emb_weight.shape
    dim_pad = _round_up(dim, 128)
    if dim_pad != dim:
        emb_weight = jnp.pad(emb_weight, ((0, 0), (0, dim_pad - dim)))
    return emb_weight, dim, dim_pad


def _pick_row_block(n, row_bytes, vmem_cap, *, n_bufs, cap_rows):
    """Largest 8-aligned row tile fitting ~1/4 of VMEM across `n_bufs` buffers."""
    budget = vmem_cap // 4
    by_budget = max(8, (budget // (n_bufs * row_bytes)) // 8 * 8)
    block = max(8, min(cap_rows, by_budget, _round_up(n, 8)))
    # Ensure the single "parallel" grid axis has >=2 steps when possible so a
    # 2-TensorCore chip (v7x) can shard it.
    if n >= 16:
        block = max(8, min(block, _round_up(pl.cdiv(n, 2), 8)))
    return block


# ---------------------------------------------------------------------------
# pos = None fast path: scaled streaming copy of the first seq_len rows.
# ---------------------------------------------------------------------------
def _arange_kernel(emb_ref, out_ref, *, scale):
    out_ref[...] = (emb_ref[...] * scale).astype(out_ref.dtype)


# ---------------------------------------------------------------------------
# explicit pos path: exact DMA row gather.
#   pos_ref : SMEM int32[n_pad]          (scalar-prefetched positions)
#   emb_hbm : HBM  [max_seq_len, dim]    (never copied wholesale into VMEM)
#   out_ref : VMEM [block, dim]
#   buf     : VMEM [block, dim] scratch
#   sem     : single DMA semaphore (all row copies are the same size, so one
#             shared semaphore with `block` waits is sufficient)
# ---------------------------------------------------------------------------
def _gather_dma_kernel(pos_ref, emb_hbm, out_ref, buf, sem, *, scale, block):
    base = pl.program_id(0) * block

    # TODO(synk): for very large row tiles, bound the number of in-flight DMAs
    # with a small issue/wait window instead of issue-all-then-wait-all.
    @pl.loop(0, block)
    def _issue(r):
        row = pos_ref[base + r]
        pltpu.make_async_copy(emb_hbm.at[row], buf.at[r], sem).start()

    @pl.loop(0, block)
    def _wait(r):
        pltpu.make_async_copy(emb_hbm.at[0], buf.at[r], sem).wait()

    out_ref[...] = (buf[...] * scale).astype(out_ref.dtype)


def absolute_positional_embedding(x, emb_weight, pos=None):
    """JAX/Pallas equivalent of AbsolutePositionalEmbedding.forward."""
    seq_len = x.shape[1]
    max_seq_len, dim_orig = emb_weight.shape
    assert seq_len <= max_seq_len, (
        f"sequence length {seq_len} exceeds max_seq_len {max_seq_len}")
    scale = float(dim_orig) ** (-0.5)

    emb_p, dim, dim_pad = _pad_feature_dim(emb_weight)
    itemsize = jnp.dtype(emb_p.dtype).itemsize
    row_bytes = dim_pad * itemsize
    vmem_cap = _vmem_capacity_bytes()
    # Explicit scoped-VMEM limit: safe on every generation (<= physical) and
    # comfortably above anything the block sizing below can request.
    vmem_limit = int(vmem_cap // 2)

    if pos is None:
        # Contiguous rows [0, seq_len): scaled, double-buffered streaming copy.
        n = seq_len
        # in + out, each double-buffered -> 4 row tiles resident.
        block = _pick_row_block(n, row_bytes, vmem_cap, n_bufs=4, cap_rows=1024)
        grid = (pl.cdiv(n, block),)
        out = pl.pallas_call(
            functools.partial(_arange_kernel, scale=scale),
            out_shape=jax.ShapeDtypeStruct((n, dim_pad), emb_p.dtype),
            grid=grid,
            in_specs=[pl.BlockSpec((block, dim_pad), lambda i: (i, 0))],
            out_specs=pl.BlockSpec((block, dim_pad), lambda i: (i, 0)),
            compiler_params=pltpu.CompilerParams(
                dimension_semantics=("parallel",),
                vmem_limit_bytes=vmem_limit),
        )(emb_p)
        return out[:, :dim] if dim_pad != dim else out

    # Arbitrary (possibly non-contiguous) positions: exact DMA row gather.
    pos = jnp.reshape(pos, (-1,)).astype(jnp.int32)
    n = int(pos.shape[0])
    # 2 double-buffered output tiles + 1 gather scratch tile resident.
    block = _pick_row_block(n, row_bytes, vmem_cap, n_bufs=3, cap_rows=256)
    grid0 = pl.cdiv(n, block)
    n_pad_rows = grid0 * block
    # Clamp indices so every row DMA stays in bounds (PyTorch nn.Embedding
    # would raise on out-of-range indices; here they read a clamped row).
    # Padding entries for the ragged final tile gather row 0 and are masked
    # away on the output store.
    pos_clamped = jnp.clip(pos, 0, max_seq_len - 1)
    pos_padded = jnp.pad(pos_clamped, (0, n_pad_rows - n))

    out = pl.pallas_call(
        functools.partial(_gather_dma_kernel, scale=scale, block=block),
        out_shape=jax.ShapeDtypeStruct((n, dim_pad), emb_p.dtype),
        grid_spec=pltpu.PrefetchScalarGridSpec(
            num_scalar_prefetch=1,
            grid=(grid0,),
            in_specs=[pl.BlockSpec(memory_space=pl.ANY)],   # table stays in HBM
            out_specs=pl.BlockSpec((block, dim_pad), lambda i, pos_ref: (i, 0)),
            scratch_shapes=[pltpu.VMEM((block, dim_pad), emb_p.dtype),
                            pltpu.SemaphoreType.DMA(())],
        ),
        compiler_params=pltpu.CompilerParams(
            dimension_semantics=("parallel",),
            vmem_limit_bytes=vmem_limit),
    )(pos_padded, emb_p)
    return out[:, :dim] if dim_pad != dim else out


if __name__ == "__main__":
    # Matches nn.Embedding(max_seq_len, dim) with nn.init.normal_(std=0.01).
    dim = 128
    max_seq_len = 512
    batch, seq_len = 2, 8

    key = jax.random.PRNGKey(0)
    k_emb, k_x, k_pos = jax.random.split(key, 3)
    emb_weight = (jax.random.normal(k_emb, (max_seq_len, dim),
                                    dtype=jnp.float32) * 0.01)
    # x's values are irrelevant — only its seq dimension (axis 1) is used.
    x = jax.random.normal(k_x, (batch, seq_len, dim), dtype=jnp.float32)
    scale = dim ** (-0.5)

    # Path 1: pos=None (arange streaming fast path).
    out = jax.block_until_ready(absolute_positional_embedding(x, emb_weight))
    ref = emb_weight[:seq_len] * scale
    assert out.shape == (seq_len, dim)
    assert jnp.allclose(out, ref, atol=1e-7, rtol=1e-6)

    # Path 1b: longer, non-multiple-of-block sequence (ragged tiles, >=2 grid steps).
    seq_len_b = 300
    x_b = jnp.zeros((batch, seq_len_b, dim), dtype=jnp.float32)
    out_b = jax.block_until_ready(absolute_positional_embedding(x_b, emb_weight))
    ref_b = emb_weight[:seq_len_b] * scale
    assert out_b.shape == (seq_len_b, dim)
    assert jnp.allclose(out_b, ref_b, atol=1e-7, rtol=1e-6)

    # Path 2: explicit non-contiguous positions (exact DMA row gather).
    pos = jax.random.permutation(k_pos, max_seq_len)[:seq_len]
    out2 = jax.block_until_ready(
        absolute_positional_embedding(x, emb_weight, pos=pos))
    ref2 = emb_weight[pos] * scale
    assert out2.shape == (seq_len, dim)
    assert jnp.allclose(out2, ref2, atol=1e-7, rtol=1e-6)

    print("KERNEL_OK")
</pallas_src>

<mosaic_0001>
module attributes {stable_mosaic.version = 11 : i64} {
  func.func @_arange_kernel(%arg0: i32, %arg1: memref<8x128xf32, #tpu.memory_space<vmem>>, %arg2: memref<8x128xf32, #tpu.memory_space<vmem>>) attributes {dimension_semantics = [#tpu.dimension_semantics<parallel>], iteration_bounds = array<i64: 1>, scalar_prefetch = 0 : i64, scratch_operands = 0 : i64, tpu.core_type = #tpu.core_type<tc>, window_params = [{transform_indices = @transform_0, window_bounds = array<i64: 8, 128>}, {transform_indices = @transform_1, window_bounds = array<i64: 8, 128>}]} {
    %c0 = arith.constant 0 : index
    %c0_0 = arith.constant 0 : index
    %0 = vector.load %arg1[%c0, %c0_0] : memref<8x128xf32, #tpu.memory_space<vmem>>, vector<8x128xf32>
    %cst = arith.constant 0.0883883461 : f32
    %1 = vector.broadcast %cst : f32 to vector<8x128xf32>
    %2 = arith.mulf %0, %1 : vector<8x128xf32>
    %c0_1 = arith.constant 0 : index
    %c0_2 = arith.constant 0 : index
    %3 = vector.load %arg2[%c0_1, %c0_2] : memref<8x128xf32, #tpu.memory_space<vmem>>, vector<8x128xf32>
    tpu.vector_store %arg2[%c0_1, %c0_2], %2 {strides = array<i32>} : memref<8x128xf32, #tpu.memory_space<vmem>>, vector<8x128xf32>,
    return
  }
  func.func @transform_0(%arg0: i32) -> (i32, i32) {
    %c0_i32 = arith.constant 0 : i32
    %c0_i32_0 = arith.constant 0 : i32
    return %arg0, %c0_i32 : i32, i32
  }
  func.func @transform_1(%arg0: i32) -> (i32, i32) {
    %c0_i32 = arith.constant 0 : i32
    %c0_i32_0 = arith.constant 0 : i32
    return %arg0, %c0_i32 : i32, i32
  }
}

</mosaic_0001>

<llo_original>
// kernel: tpu_custom_call.1
$region0: #{tpu_custom_call.1}
  #allocation0 [shape = 'u32[]', space=smem, size = 0x4, offset = 0x4, fixed_abs, tag = 'smem constant byte address 0x4 - core index']
  #allocation1 [shape = 'u32[144,128]{1,0:T(1,128)}', space=vmem, size = 0x12000, scoped, tag = 'internal scratch']
  %s0 = inlined_call_operand.hbm [shape: f32[512,128], index: 0, kind: input, shape index: {}]
  %s1 = inlined_call_operand.hbm [shape: f32[8,128], index: 1, kind: output, shape index: {}]
  %s2 = sld [smem:[#allocation0]]
  $region18: #{tpu_custom_call.1} parent=0
    _
  %s4 = ssub.s32 1, %s2
  %s5 = scalar_select 0, %s4, %s2
  $region1: #{tpu_custom_call.1} parent=0
    #allocation2 [shape = 'u8[4096]{0}', space=vmem, size = 0x1000, scoped, tag = 'input window, operand 0, single buffered']
    #allocation3 [shape = 's32[1]{0}', space=sflag, size = 0x4, scoped, tag = 'scoped memory for tpu_custom_call.1']
    #allocation4 [shape = 's32[1]{0}', space=sflag, size = 0x4, scoped, tag = 'scoped memory for tpu_custom_call.1']
    #allocation5 [shape = 'u8[4096]{0}', space=vmem, size = 0x1000, scoped, tag = 'output window, operand 0, single buffered']
    %6 = vsyncpa [#allocation3], 0
    %7 = vsyncpa [#allocation4], 0
    // Predicated region
    $region2: #{tpu_custom_call.1} parent=1 // pred_check
      _
    $region3: #{tpu_custom_call.1} parent=1 // pred_check_branch
      %9 = sbr.rel (0) target = $region5
    $region4: #{tpu_custom_call.1} parent=1 // pred_region
      %s11 = ssub.s32 128, 128
      %12 = vsyncadd [#allocation3], %s11
      %s14 = sshll.u32 [#allocation2], 4
      %s15 = int_to_ptr.vmem [resolvable:$true] %s14
      %17 = dma.hbm_to_vmem [thread:$0]  %s0, 128, %s15, [#allocation3]
    $region5: #{tpu_custom_call.1} parent=1 // pred_fallthru
      _
    // Predicated region
    $region6: #{tpu_custom_call.1} parent=1 // pred_check
      _
    $region7: #{tpu_custom_call.1} parent=1 // pred_check_branch
      %19 = sbr.rel (0) target = $region9
    $region8: #{tpu_custom_call.1} parent=1 // pred_region
      %20 = dma.done [#allocation3], 128
    $region9: #{tpu_custom_call.1} parent=1 // pred_fallthru
      _
    %v21 = vld [vmem:[#allocation2] sm:$0xff]
    %v22 = vmul.f32 %v21, 0.088388346
    %23 = vst [vmem:[#allocation5] sm:$0xff] %v22
    // Predicated region
    $region10: #{tpu_custom_call.1} parent=1 // pred_check
      _
    $region11: #{tpu_custom_call.1} parent=1 // pred_check_branch
      %25 = sbr.rel (0) target = $region13
    $region12: #{tpu_custom_call.1} parent=1 // pred_region
      %s27 = ssub.s32 128, 128
      %28 = vsyncadd [#allocation4], %s27
      %s30 = sshll.u32 [#allocation5], 4
      %s31 = int_to_ptr.vmem [resolvable:$true] %s30
      %33 = dma.vmem_to_hbm [thread:$0]  %s31, 128, %s1, [#allocation4]
    $region13: #{tpu_custom_call.1} parent=1 // pred_fallthru
      _
    // Predicated region
    $region14: #{tpu_custom_call.1} parent=1 // pred_check
      _
    $region15: #{tpu_custom_call.1} parent=1 // pred_check_branch
      %35 = sbr.rel (0) target = $region17
    $region16: #{tpu_custom_call.1} parent=1 // pred_region
      %36 = dma.done [#allocation4], 128
    $region17: #{tpu_custom_call.1} parent=1 // pred_fallthru
      _
    %37 = vsyncpa [#allocation3], 1
    %38 = vsyncpa [#allocation4], 1

</llo_original>
